<compile_context>
chip_gen: v6e
topology: v6e:2x2x1
jax: 0.10.0
libtpu: 0.0.40
codegen_flags: <defaults>
</compile_context>

<pallas_src>
import functools

import jax
import jax.numpy as jnp
from jax.experimental import pallas as pl
from jax.experimental.pallas import tpu as pltpu


def _channel_attention_kernel(x_ref, w1_ref, w2_ref, gate_ref, xo_ref, *, inv_hw):
    """Single invocation over the whole batch.

    x_ref   : (B, C, HW)  activations; channels on sublanes, spatial on lanes
    w1_ref  : (Chid, C)   fc1 weight (1x1 conv, squeezed)
    w2_ref  : (C, Chid)   fc2 weight (1x1 conv, squeezed)
    gate_ref: (B, C, 1)   sigmoid gate (the module's forward output)
    xo_ref  : (B, C, HW)  fused gate application: x * gate
    """
    B, C, HW = x_ref.shape

    x = x_ref[...]                                   # native dtype (no full-tile cast)
    x2d = x.reshape(B * C, HW)                       # leading-dim merge: layout no-op

    # Global average pool on the MXU (one matmul, f32 accumulation).
    ones_col = jnp.ones((HW, 1), dtype=x.dtype)
    avg = jnp.dot(x2d, ones_col,
                  preferred_element_type=jnp.float32) * inv_hw        # (B*C, 1) f32
    # Global max pool: XLU lane reduction in native dtype, tiny f32 cast after.
    mx = jnp.max(x2d, axis=-1, keepdims=True).astype(jnp.float32)     # (B*C, 1) f32

    # Stack pooled vectors as columns of a (C, 2B) matrix:
    #   column b     = avg pool of batch b
    #   column B + b = max pool of batch b
    lane = jax.lax.broadcasted_iota(jnp.int32, (C, 2 * B), 1)
    pooled = jnp.zeros((C, 2 * B), dtype=jnp.float32)
    for b in range(B):                                # B is static -> unrolled
        avg_b = avg[b * C:(b + 1) * C]                # (C, 1) aligned sublane slice
        max_b = mx[b * C:(b + 1) * C]                 # (C, 1)
        pooled = pooled + jnp.where(lane == b, avg_b, 0.0)
        pooled = pooled + jnp.where(lane == B + b, max_b, 0.0)

    # Shared MLP: ONE fc1 and ONE fc2 matmul over all branches and batches.
    w1 = w1_ref[...].astype(jnp.float32)              # (Chid, C)
    w2 = w2_ref[...].astype(jnp.float32)              # (C, Chid)
    h = jnp.maximum(
        jnp.dot(w1, pooled, preferred_element_type=jnp.float32), 0.0)  # (Chid, 2B)
    y = jnp.dot(w2, h, preferred_element_type=jnp.float32)             # (C, 2B)

    # avg branch + max branch per batch, then sigmoid (all in f32).
    gate = jax.nn.sigmoid(y[:, :B] + y[:, B:])        # (C, B)

    for b in range(B):
        g_b = gate[:, b:b + 1]                                         # (C, 1)
        gate_ref[b] = g_b.astype(gate_ref.dtype)
        xo_ref[b] = (x[b] * g_b).astype(xo_ref.dtype)                  # fused x * gate


def channel_attention_pallas(x_nchw, fc1_weight, fc2_weight):
    """Pallas ChannelAttention.

    Returns (gate, gated_x):
      gate    : (B, C, 1, 1) -- exactly the PyTorch module's forward output
      gated_x : (B, C, H, W) -- x * gate, fused for free since x is already in VMEM
    """
    B, C, H, W = x_nchw.shape
    Chid = fc1_weight.shape[0]
    assert fc1_weight.shape == (Chid, C, 1, 1)
    assert fc2_weight.shape == (C, Chid, 1, 1)

    HW = H * W
    x = x_nchw.reshape(B, C, HW)          # free row-major reshape (no transpose)
    w1 = fc1_weight.reshape(Chid, C)      # 1x1 conv == linear
    w2 = fc2_weight.reshape(C, Chid)

    kernel = functools.partial(_channel_attention_kernel, inv_hw=1.0 / HW)

    gate, gated = pl.pallas_call(
        kernel,
        out_shape=(
            jax.ShapeDtypeStruct((B, C, 1), x_nchw.dtype),
            jax.ShapeDtypeStruct((B, C, HW), x_nchw.dtype),
        ),
        grid_spec=pltpu.PrefetchScalarGridSpec(
            num_scalar_prefetch=0,
            grid=(1,),   # single step: whole problem fits VMEM; no per-step overhead
            in_specs=[
                pl.BlockSpec((B, C, HW), lambda i: (0, 0, 0)),
                pl.BlockSpec((Chid, C), lambda i: (0, 0)),
                pl.BlockSpec((C, Chid), lambda i: (0, 0)),
            ],
            out_specs=(
                pl.BlockSpec((B, C, 1), lambda i: (0, 0, 0)),
                pl.BlockSpec((B, C, HW), lambda i: (0, 0, 0)),
            ),
        ),
        compiler_params=pltpu.CompilerParams(
            dimension_semantics=("arbitrary",)),
    )(x, w1, w2)

    return gate.reshape(B, C, 1, 1), gated.reshape(B, C, H, W)


if __name__ == "__main__":
    # Module config: ChannelAttention(in_planes=64).  The PyTorch module
    # hard-codes hidden = in_planes // 16 (the `ratio` arg is unused).
    B, C, H, W = 2, 64, 16, 16
    Chid = C // 16

    key = jax.random.PRNGKey(0)
    kx, k1, k2 = jax.random.split(key, 3)
    x = jax.random.normal(kx, (B, C, H, W), dtype=jnp.float32)
    fc1_w = 0.1 * jax.random.normal(k1, (Chid, C, 1, 1), dtype=jnp.float32)
    fc2_w = 0.1 * jax.random.normal(k2, (C, Chid, 1, 1), dtype=jnp.float32)

    gate, gated = channel_attention_pallas(x, fc1_w, fc2_w)
    gate, gated = jax.block_until_ready((gate, gated))

    # Pure-JAX reference (same semantics as the PyTorch forward).
    w1 = fc1_w.reshape(Chid, C)
    w2 = fc2_w.reshape(C, Chid)
    avg = jnp.mean(x, axis=(2, 3))                          # (B, C)
    mx = jnp.max(x, axis=(2, 3))                            # (B, C)
    mlp = lambda p: jnp.maximum(p @ w1.T, 0.0) @ w2.T       # (B, C)
    gate_ref = jax.nn.sigmoid(mlp(avg) + mlp(mx)).reshape(B, C, 1, 1)
    gated_ref = x * gate_ref

    assert gate.shape == gate_ref.shape, (gate.shape, gate_ref.shape)
    assert gated.shape == gated_ref.shape, (gated.shape, gated_ref.shape)
    assert jnp.allclose(gate, gate_ref, atol=1e-5, rtol=1e-5), "gate mismatch"
    assert jnp.allclose(gated, gated_ref, atol=1e-5, rtol=1e-5), "gated-x mismatch"

    print("KERNEL_OK")
</pallas_src>

<mosaic_0001>
module attributes {stable_mosaic.version = 11 : i64} {
  func.func @_channel_attention_kernel(%arg0: i32, %arg1: memref<2x64x256xf32, #tpu.memory_space<vmem>>, %arg2: memref<4x64xf32, #tpu.memory_space<vmem>>, %arg3: memref<64x4xf32, #tpu.memory_space<vmem>>, %arg4: memref<2x64x1xf32, #tpu.memory_space<vmem>>, %arg5: memref<2x64x256xf32, #tpu.memory_space<vmem>>) attributes {dimension_semantics = [#tpu.dimension_semantics<arbitrary>], iteration_bounds = array<i64: 1>, scalar_prefetch = 0 : i64, scratch_operands = 0 : i64, tpu.core_type = #tpu.core_type<tc>, window_params = [{pipeline_mode = #tpu.pipeline_mode<synchronous>, transform_indices = @transform_0, window_bounds = array<i64: 2, 64, 256>}, {pipeline_mode = #tpu.pipeline_mode<synchronous>, transform_indices = @transform_1, window_bounds = array<i64: 4, 64>}, {pipeline_mode = #tpu.pipeline_mode<synchronous>, transform_indices = @transform_2, window_bounds = array<i64: 64, 4>}, {pipeline_mode = #tpu.pipeline_mode<synchronous>, transform_indices = @transform_3, window_bounds = array<i64: 2, 64, 1>}, {pipeline_mode = #tpu.pipeline_mode<synchronous>, transform_indices = @transform_4, window_bounds = array<i64: 2, 64, 256>}]} {
    %c0 = arith.constant 0 : index
    %c0_0 = arith.constant 0 : index
    %c0_1 = arith.constant 0 : index
    %0 = vector.load %arg1[%c0, %c0_0, %c0_1] : memref<2x64x256xf32, #tpu.memory_space<vmem>>, vector<2x64x256xf32>
    %1 = vector.shape_cast %0 : vector<2x64x256xf32> to vector<128x256xf32>
    %cst = arith.constant 1.000000e+00 : f32
    %2 = vector.broadcast %cst : f32 to vector<256x1xf32>
    %cst_2 = arith.constant dense<0.000000e+00> : vector<128x1xf32>
    %3 = tpu.matmul %1, %2, %cst_2 {dimension_numbers = #tpu.dot_dimension_numbers<[1], [0], [0], [1], [0, 0, 1, 1], [], []>} : vector<128x256xf32>, vector<256x1xf32>, vector<128x1xf32> -> vector<128x1xf32>
    %cst_3 = arith.constant 3.906250e-03 : f32
    %4 = vector.broadcast %cst_3 : f32 to vector<128x1xf32>
    %5 = arith.mulf %3, %4 : vector<128x1xf32>
    %cst_4 = arith.constant dense<0xFF800000> : vector<128xf32>
    %6 = vector.multi_reduction <maximumf>, %1, %cst_4 [1] : vector<128x256xf32> to vector<128xf32>
    %7 = vector.shape_cast %6 : vector<128xf32> to vector<128x1xf32>
    %8 = tpu.iota {dimensions = array<i32: 1>} : vector<64x4xi32>
    %cst_5 = arith.constant 0.000000e+00 : f32
    %9 = vector.broadcast %cst_5 : f32 to vector<64x4xf32>
    %10 = vector.extract_strided_slice %5 {offsets = [0, 0], sizes = [64, 1], strides = [1, 1]} : vector<128x1xf32> to vector<64x1xf32>
    %11 = vector.extract_strided_slice %7 {offsets = [0, 0], sizes = [64, 1], strides = [1, 1]} : vector<128x1xf32> to vector<64x1xf32>
    %c0_i32 = arith.constant 0 : i32
    %12 = vector.broadcast %c0_i32 : i32 to vector<64x4xi32>
    %13 = arith.cmpi eq, %8, %12 : vector<64x4xi32>
    %cst_6 = arith.constant 0.000000e+00 : f32
    %14 = vector.shape_cast %10 : vector<64x1xf32> to vector<64x1xf32>
    %15 = vector.broadcast %14 : vector<64x1xf32> to vector<64x4xf32>
    %16 = vector.broadcast %cst_6 : f32 to vector<64x4xf32>
    %17 = arith.select %13, %15, %16 : vector<64x4xi1>, vector<64x4xf32>
    %18 = arith.addf %9, %17 : vector<64x4xf32>
    %c2_i32 = arith.constant 2 : i32
    %19 = vector.broadcast %c2_i32 : i32 to vector<64x4xi32>
    %20 = arith.cmpi eq, %8, %19 : vector<64x4xi32>
    %cst_7 = arith.constant 0.000000e+00 : f32
    %21 = vector.shape_cast %11 : vector<64x1xf32> to vector<64x1xf32>
    %22 = vector.broadcast %21 : vector<64x1xf32> to vector<64x4xf32>
    %23 = vector.broadcast %cst_7 : f32 to vector<64x4xf32>
    %24 = arith.select %20, %22, %23 : vector<64x4xi1>, vector<64x4xf32>
    %25 = arith.addf %18, %24 : vector<64x4xf32>
    %26 = vector.extract_strided_slice %5 {offsets = [64, 0], sizes = [64, 1], strides = [1, 1]} : vector<128x1xf32> to vector<64x1xf32>
    %27 = vector.extract_strided_slice %7 {offsets = [64, 0], sizes = [64, 1], strides = [1, 1]} : vector<128x1xf32> to vector<64x1xf32>
    %c1_i32 = arith.constant 1 : i32
    %28 = vector.broadcast %c1_i32 : i32 to vector<64x4xi32>
    %29 = arith.cmpi eq, %8, %28 : vector<64x4xi32>
    %cst_8 = arith.constant 0.000000e+00 : f32
    %30 = vector.shape_cast %26 : vector<64x1xf32> to vector<64x1xf32>
    %31 = vector.broadcast %30 : vector<64x1xf32> to vector<64x4xf32>
    %32 = vector.broadcast %cst_8 : f32 to vector<64x4xf32>
    %33 = arith.select %29, %31, %32 : vector<64x4xi1>, vector<64x4xf32>
    %34 = arith.addf %25, %33 : vector<64x4xf32>
    %c3_i32 = arith.constant 3 : i32
    %35 = vector.broadcast %c3_i32 : i32 to vector<64x4xi32>
    %36 = arith.cmpi eq, %8, %35 : vector<64x4xi32>
    %cst_9 = arith.constant 0.000000e+00 : f32
    %37 = vector.shape_cast %27 : vector<64x1xf32> to vector<64x1xf32>
    %38 = vector.broadcast %37 : vector<64x1xf32> to vector<64x4xf32>
    %39 = vector.broadcast %cst_9 : f32 to vector<64x4xf32>
    %40 = arith.select %36, %38, %39 : vector<64x4xi1>, vector<64x4xf32>
    %41 = arith.addf %34, %40 : vector<64x4xf32>
    %c0_10 = arith.constant 0 : index
    %c0_11 = arith.constant 0 : index
    %42 = vector.load %arg2[%c0_10, %c0_11] : memref<4x64xf32, #tpu.memory_space<vmem>>, vector<4x64xf32>
    %c0_12 = arith.constant 0 : index
    %c0_13 = arith.constant 0 : index
    %43 = vector.load %arg3[%c0_12, %c0_13] : memref<64x4xf32, #tpu.memory_space<vmem>>, vector<64x4xf32>
    %cst_14 = arith.constant dense<0.000000e+00> : vector<4x4xf32>
    %44 = tpu.matmul %42, %41, %cst_14 {dimension_numbers = #tpu.dot_dimension_numbers<[1], [0], [0], [1], [0, 0, 1, 1], [], []>} : vector<4x64xf32>, vector<64x4xf32>, vector<4x4xf32> -> vector<4x4xf32>
    %cst_15 = arith.constant 0.000000e+00 : f32
    %45 = vector.broadcast %cst_15 : f32 to vector<4x4xf32>
    %46 = arith.maximumf %44, %45 : vector<4x4xf32>
    %cst_16 = arith.constant dense<0.000000e+00> : vector<64x4xf32>
    %47 = tpu.matmul %43, %46, %cst_16 {dimension_numbers = #tpu.dot_dimension_numbers<[1], [0], [0], [1], [0, 0, 1, 1], [], []>} : vector<64x4xf32>, vector<4x4xf32>, vector<64x4xf32> -> vector<64x4xf32>
    %48 = vector.extract_strided_slice %47 {offsets = [0, 0], sizes = [64, 2], strides = [1, 1]} : vector<64x4xf32> to vector<64x2xf32>
    %49 = vector.extract_strided_slice %47 {offsets = [0, 2], sizes = [64, 2], strides = [1, 1]} : vector<64x4xf32> to vector<64x2xf32>
    %50 = arith.addf %48, %49 : vector<64x2xf32>
    %51 = arith.negf %50 : vector<64x2xf32>
    %52 = math.exp %51 : vector<64x2xf32>
    %cst_17 = arith.constant 1.000000e+00 : f32
    %53 = vector.broadcast %cst_17 : f32 to vector<64x2xf32>
    %54 = arith.addf %53, %52 : vector<64x2xf32>
    %55 = arith.divf %53, %54 : vector<64x2xf32>
    %56 = vector.extract_strided_slice %55 {offsets = [0, 0], sizes = [64, 1], strides = [1, 1]} : vector<64x2xf32> to vector<64x1xf32>
    %c0_18 = arith.constant 0 : index
    %c0_19 = arith.constant 0 : index
    %c0_20 = arith.constant 0 : index
    %57 = vector.load %arg4[%c0_18, %c0_19, %c0_20] : memref<2x64x1xf32, #tpu.memory_space<vmem>>, vector<1x64x1xf32>
    %58 = vector.shape_cast %57 : vector<1x64x1xf32> to vector<64x1xf32>
    %59 = vector.shape_cast %56 : vector<64x1xf32> to vector<1x64x1xf32>
    tpu.vector_store %arg4[%c0_18, %c0_19, %c0_20], %59 {strides = array<i32>} : memref<2x64x1xf32, #tpu.memory_space<vmem>>, vector<1x64x1xf32>,
    %60 = vector.extract_strided_slice %0 {offsets = [0, 0, 0], sizes = [1, 64, 256], strides = [1, 1, 1]} : vector<2x64x256xf32> to vector<1x64x256xf32>
    %61 = vector.shape_cast %60 : vector<1x64x256xf32> to vector<64x256xf32>
    %62 = vector.broadcast %56 : vector<64x1xf32> to vector<64x256xf32>
    %63 = arith.mulf %61, %62 : vector<64x256xf32>
    %c0_21 = arith.constant 0 : index
    %c0_22 = arith.constant 0 : index
    %c0_23 = arith.constant 0 : index
    %64 = vector.load %arg5[%c0_21, %c0_22, %c0_23] : memref<2x64x256xf32, #tpu.memory_space<vmem>>, vector<1x64x256xf32>
    %65 = vector.shape_cast %64 : vector<1x64x256xf32> to vector<64x256xf32>
    %66 = vector.shape_cast %63 : vector<64x256xf32> to vector<1x64x256xf32>
    tpu.vector_store %arg5[%c0_21, %c0_22, %c0_23], %66 {strides = array<i32>} : memref<2x64x256xf32, #tpu.memory_space<vmem>>, vector<1x64x256xf32>,
    %67 = vector.extract_strided_slice %55 {offsets = [0, 1], sizes = [64, 1], strides = [1, 1]} : vector<64x2xf32> to vector<64x1xf32>
    %c1 = arith.constant 1 : index
    %c0_24 = arith.constant 0 : index
    %c0_25 = arith.constant 0 : index
    %68 = vector.load %arg4[%c1, %c0_24, %c0_25] : memref<2x64x1xf32, #tpu.memory_space<vmem>>, vector<1x64x1xf32>
    %69 = vector.shape_cast %68 : vector<1x64x1xf32> to vector<64x1xf32>
    %70 = vector.shape_cast %67 : vector<64x1xf32> to vector<1x64x1xf32>
    tpu.vector_store %arg4[%c1, %c0_24, %c0_25], %70 {strides = array<i32>} : memref<2x64x1xf32, #tpu.memory_space<vmem>>, vector<1x64x1xf32>,
    %71 = vector.extract_strided_slice %0 {offsets = [1, 0, 0], sizes = [1, 64, 256], strides = [1, 1, 1]} : vector<2x64x256xf32> to vector<1x64x256xf32>
    %72 = vector.shape_cast %71 : vector<1x64x256xf32> to vector<64x256xf32>
    %73 = vector.broadcast %67 : vector<64x1xf32> to vector<64x256xf32>
    %74 = arith.mulf %72, %73 : vector<64x256xf32>
    %c1_26 = arith.constant 1 : index
    %c0_27 = arith.constant 0 : index
    %c0_28 = arith.constant 0 : index
    %75 = vector.load %arg5[%c1_26, %c0_27, %c0_28] : memref<2x64x256xf32, #tpu.memory_space<vmem>>, vector<1x64x256xf32>
    %76 = vector.shape_cast %75 : vector<1x64x256xf32> to vector<64x256xf32>
    %77 = vector.shape_cast %74 : vector<64x256xf32> to vector<1x64x256xf32>
    tpu.vector_store %arg5[%c1_26, %c0_27, %c0_28], %77 {strides = array<i32>} : memref<2x64x256xf32, #tpu.memory_space<vmem>>, vector<1x64x256xf32>,
    return
  }
  func.func @transform_0(%arg0: i32) -> (i32, i32, i32) {
    %c0_i32 = arith.constant 0 : i32
    %c0_i32_0 = arith.constant 0 : i32
    %c0_i32_1 = arith.constant 0 : i32
    %c0_i32_2 = arith.constant 0 : i32
    return %c0_i32, %c0_i32_0, %c0_i32_1 : i32, i32, i32
  }
  func.func @transform_1(%arg0: i32) -> (i32, i32) {
    %c0_i32 = arith.constant 0 : i32
    %c0_i32_0 = arith.constant 0 : i32
    %c0_i32_1 = arith.constant 0 : i32
    return %c0_i32, %c0_i32_0 : i32, i32
  }
  func.func @transform_2(%arg0: i32) -> (i32, i32) {
    %c0_i32 = arith.constant 0 : i32
    %c0_i32_0 = arith.constant 0 : i32
    %c0_i32_1 = arith.constant 0 : i32
    return %c0_i32, %c0_i32_0 : i32, i32
  }
  func.func @transform_3(%arg0: i32) -> (i32, i32, i32) {
    %c0_i32 = arith.constant 0 : i32
    %c0_i32_0 = arith.constant 0 : i32
    %c0_i32_1 = arith.constant 0 : i32
    %c0_i32_2 = arith.constant 0 : i32
    return %c0_i32, %c0_i32_0, %c0_i32_1 : i32, i32, i32
  }
  func.func @transform_4(%arg0: i32) -> (i32, i32, i32) {
    %c0_i32 = arith.constant 0 : i32
    %c0_i32_0 = arith.constant 0 : i32
    %c0_i32_1 = arith.constant 0 : i32
    %c0_i32_2 = arith.constant 0 : i32
    return %c0_i32, %c0_i32_0, %c0_i32_1 : i32, i32, i32
  }
}

</mosaic_0001>

<llo_original>
// kernel: tpu_custom_call.1
$region0: #{tpu_custom_call.1}
  #allocation0 [shape = 'u32[]', space=smem, size = 0x4, offset = 0x4, fixed_abs, tag = 'smem constant byte address 0x4 - core index']
  #allocation1 [shape = 'u32[144,128]{1,0:T(1,128)}', space=vmem, size = 0x12000, scoped, tag = 'internal scratch']
  %s0 = inlined_call_operand.hbm [shape: f32[2,64,256], index: 0, kind: input, shape index: {}]
  %s1 = inlined_call_operand.vmem [shape: f32[4,64], index: 1, kind: input, shape index: {}]
  %s2 = inlined_call_operand.vmem [shape: f32[64,4], index: 2, kind: input, shape index: {}]
  %s3 = inlined_call_operand.vmem [shape: f32[2,64,1], index: 3, kind: output, shape index: {0}]
  %s4 = inlined_call_operand.hbm [shape: f32[2,64,256], index: 4, kind: output, shape index: {1}]
  %5 = xla_tuple %s3, %s4
  %s6 = sld [smem:[#allocation0]]
  $region34: #{tpu_custom_call.1} parent=0
    _
  %s8 = ssub.s32 1, %s6
  %s9 = scalar_select 0, %s8, %s6
  $region1: #{tpu_custom_call.1} parent=0
    #allocation2 [shape = 'u8[131072]{0}', space=vmem, size = 0x20000, scoped, tag = 'input window, operand 0, single buffered']
    #allocation3 [shape = 's32[1]{0}', space=sflag, size = 0x4, scoped, tag = 'scoped memory for tpu_custom_call.1']
    #allocation4 [shape = 's32[1]{0}', space=sflag, size = 0x4, scoped, tag = 'scoped memory for tpu_custom_call.1']
    #allocation5 [shape = 'u8[131072]{0}', space=vmem, size = 0x20000, scoped, tag = 'output window, operand 1, single buffered']
    %10 = vsyncpa [#allocation3], 0
    %11 = vsyncpa [#allocation4], 0
    // Predicated region
    $region2: #{tpu_custom_call.1} parent=1 // pred_check
      _
    $region3: #{tpu_custom_call.1} parent=1 // pred_check_branch
      %13 = sbr.rel (0) target = $region5
    $region4: #{tpu_custom_call.1} parent=1 // pred_region
      %s15 = ssub.s32 4096, 4096
      %16 = vsyncadd [#allocation3], %s15
      %s17 = sshll.u32 [#allocation2], 4
      %s18 = int_to_ptr.vmem [resolvable:$true] %s17
      %23 = dma.hbm_to_vmem [thread:$0]  %s0, 4096, %s18, [#allocation3], 256, 256, 16
    $region5: #{tpu_custom_call.1} parent=1 // pred_fallthru
      _
    // Predicated region
    $region6: #{tpu_custom_call.1} parent=1 // pred_check
      _
    $region7: #{tpu_custom_call.1} parent=1 // pred_check_branch
      %25 = sbr.rel (0) target = $region9
    $region8: #{tpu_custom_call.1} parent=1 // pred_region
      _
    $region9: #{tpu_custom_call.1} parent=1 // pred_fallthru
      _
    // Predicated region
    $region10: #{tpu_custom_call.1} parent=1 // pred_check
      _
    $region11: #{tpu_custom_call.1} parent=1 // pred_check_branch
      %27 = sbr.rel (0) target = $region13
    $region12: #{tpu_custom_call.1} parent=1 // pred_region
      _
    $region13: #{tpu_custom_call.1} parent=1 // pred_fallthru
      _
    // Predicated region
    $region14: #{tpu_custom_call.1} parent=1 // pred_check
      _
    $region15: #{tpu_custom_call.1} parent=1 // pred_check_branch
      %29 = sbr.rel (0) target = $region17
    $region16: #{tpu_custom_call.1} parent=1 // pred_region
      %30 = dma.done [#allocation3], 4096
    $region17: #{tpu_custom_call.1} parent=1 // pred_fallthru
      _
    %v31 = vld [vmem:[#allocation2] sm:$0xff]
    %v32 = vld [vmem:[#allocation2 + $0x8] sm:$0xff]
    %v33 = vld [vmem:[#allocation2 + $0x10] sm:$0xff]
    %v34 = vld [vmem:[#allocation2 + $0x18] sm:$0xff]
    %v35 = vld [vmem:[#allocation2 + $0x20] sm:$0xff]
    %v36 = vld [vmem:[#allocation2 + $0x28] sm:$0xff]
    %v37 = vld [vmem:[#allocation2 + $0x30] sm:$0xff]
    %v38 = vld [vmem:[#allocation2 + $0x38] sm:$0xff]
    %v39 = vld [vmem:[#allocation2 + $0x40] sm:$0xff]
    %v40 = vld [vmem:[#allocation2 + $0x48] sm:$0xff]
    %v41 = vld [vmem:[#allocation2 + $0x50] sm:$0xff]
    %v42 = vld [vmem:[#allocation2 + $0x58] sm:$0xff]
    %v43 = vld [vmem:[#allocation2 + $0x60] sm:$0xff]
    %v44 = vld [vmem:[#allocation2 + $0x68] sm:$0xff]
    %v45 = vld [vmem:[#allocation2 + $0x70] sm:$0xff]
    %v46 = vld [vmem:[#allocation2 + $0x78] sm:$0xff]
    %v47 = vld [vmem:[#allocation2 + $0x80] sm:$0xff]
    %v48 = vld [vmem:[#allocation2 + $0x88] sm:$0xff]
    %v49 = vld [vmem:[#allocation2 + $0x90] sm:$0xff]
    %v50 = vld [vmem:[#allocation2 + $0x98] sm:$0xff]
    %v51 = vld [vmem:[#allocation2 + $0xa0] sm:$0xff]
    %v52 = vld [vmem:[#allocation2 + $0xa8] sm:$0xff]
    %v53 = vld [vmem:[#allocation2 + $0xb0] sm:$0xff]
    %v54 = vld [vmem:[#allocation2 + $0xb8] sm:$0xff]
    %v55 = vld [vmem:[#allocation2 + $0xc0] sm:$0xff]
    %v56 = vld [vmem:[#allocation2 + $0xc8] sm:$0xff]
    %v57 = vld [vmem:[#allocation2 + $0xd0] sm:$0xff]
    %v58 = vld [vmem:[#allocation2 + $0xd8] sm:$0xff]
    %v59 = vld [vmem:[#allocation2 + $0xe0] sm:$0xff]
    %v60 = vld [vmem:[#allocation2 + $0xe8] sm:$0xff]
    %v61 = vld [vmem:[#allocation2 + $0xf0] sm:$0xff]
    %v62 = vld [vmem:[#allocation2 + $0xf8] sm:$0xff]
    %63 = vmatprep.subr.mxu0 0.0
    %64 = vmatpush1.msra.mxu0 1.0
    %65 = vmatprep.subr.mxu0 0.0
    %66 = vmatpush1.msra.mxu0 1.0
    %67 = vmatprep.subr.mxu0 0.0
    %68 = vmatpush1.msra.mxu0 1.0
    %69 = vmatprep.subr.mxu0 0.0
    %70 = vmatpush1.msra.mxu0 1.0
    %71 = vmatprep.subr.mxu0 0.0
    %72 = vmatpush1.msra.mxu0 1.0
    %73 = vmatprep.subr.mxu0 0.0
    %74 = vmatpush1.msra.mxu0 1.0
    %75 = vmatprep.subr.mxu0 0.0
    %76 = vmatpush1.msra.mxu0 1.0
    %77 = vmatprep.subr.mxu0 0.0
    %78 = vmatpush1.msra.mxu0 1.0
    %79 = vmatprep.subr.mxu0 0.0
    %80 = vmatpush1.msra.mxu0 1.0
    %81 = vmatprep.subr.mxu0 0.0
    %82 = vmatpush1.msra.mxu0 1.0
    %83 = vmatprep.subr.mxu0 0.0
    %84 = vmatpush1.msra.mxu0 1.0
    %85 = vmatprep.subr.mxu0 0.0
    %86 = vmatpush1.msra.mxu0 1.0
    %87 = vmatprep.subr.mxu0 0.0
    %88 = vmatpush1.msra.mxu0 1.0
    %89 = vmatprep.subr.mxu0 0.0
    %90 = vmatpush1.msra.mxu0 1.0
    %91 = vmatprep.subr.mxu0 0.0
    %92 = vmatpush1.msra.mxu0 1.0
    %93 = vmatprep.subr.mxu0 0.0
    %94 = vmatpush1.msra.mxu0 1.0
    %95 = vmatprep.subr.mxu0 0.0
    %96 = vmatpush2.msra.mxu0 1.0
    %97 = vmatprep.subr.mxu0 0.0
    %98 = vmatpush2.msra.mxu0 1.0
    %99 = vmatprep.subr.mxu0 0.0
    %100 = vmatpush2.msra.mxu0 1.0
    %101 = vmatprep.subr.mxu0 0.0
    %102 = vmatpush2.msra.mxu0 1.0
    %103 = vmatprep.subr.mxu0 0.0
    %104 = vmatpush2.msra.mxu0 1.0
    %105 = vmatprep.subr.mxu0 0.0
    %106 = vmatpush2.msra.mxu0 1.0
    %107 = vmatprep.subr.mxu0 0.0
    %108 = vmatpush2.msra.mxu0 1.0
    %109 = vmatprep.subr.mxu0 0.0
    %110 = vmatpush2.msra.mxu0 1.0
    %111 = vmatprep.subr.mxu0 0.0
    %112 = vmatpush2.msra.mxu0 1.0
    %113 = vmatprep.subr.mxu0 0.0
    %114 = vmatpush2.msra.mxu0 1.0
    %115 = vmatprep.subr.mxu0 0.0
    %116 = vmatpush2.msra.mxu0 1.0
    %117 = vmatprep.subr.mxu0 0.0
    %118 = vmatpush2.msra.mxu0 1.0
    %119 = vmatprep.subr.mxu0 0.0
    %120 = vmatpush2.msra.mxu0 1.0
    %121 = vmatprep.subr.mxu0 0.0
    %122 = vmatpush2.msra.mxu0 1.0
    %123 = vmatprep.subr.mxu0 0.0
    %124 = vmatpush2.msra.mxu0 1.0
    %125 = vmatprep.subr.mxu0 0.0
    %126 = vmatpush2.msra.mxu0 1.0
    %127 = vmatprep.mubr.f32.mxu0 %v32
    %128 = vmatmul.mubr.f32.gmra.mxu0 %v31
    %v129 = vpop.f32.mrf.mxu0
    %v130 = vadd.f32 0.0, %v129
    %v131 = vpop.f32.mrf.mxu0
    %132 = vmatprep.mubr.f32.mxu0 %v34
    %133 = vmatmul.mubr.f32.gmra.mxu0 %v33
    %v134 = vpop.f32.mrf.mxu0
    %v135 = vadd.f32 0.0, %v134
    %v136 = vpop.f32.mrf.mxu0
    %137 = vmatprep.mubr.f32.mxu0 %v36
    %138 = vmatmul.mubr.f32.gmra.mxu0 %v35
    %v139 = vpop.f32.mrf.mxu0
    %v140 = vadd.f32 0.0, %v139
    %v141 = vpop.f32.mrf.mxu0
    %142 = vmatprep.mubr.f32.mxu0 %v38
    %143 = vmatmul.mubr.f32.gmra.mxu0 %v37
    %v144 = vpop.f32.mrf.mxu0
    %v145 = vadd.f32 0.0, %v144
    %v146 = vpop.f32.mrf.mxu0
    %147 = vmatprep.mubr.f32.mxu0 %v40
    %148 = vmatmul.mubr.f32.gmra.mxu0 %v39
    %v149 = vpop.f32.mrf.mxu0
    %v150 = vadd.f32 0.0, %v149
    %v151 = vpop.f32.mrf.mxu0
    %152 = vmatprep.mubr.f32.mxu0 %v42
    %153 = vmatmul.mubr.f32.gmra.mxu0 %v41
    %v154 = vpop.f32.mrf.mxu0
    %v155 = vadd.f32 0.0, %v154
    %v156 = vpop.f32.mrf.mxu0
    %157 = vmatprep.mubr.f32.mxu0 %v44
    %158 = vmatmul.mubr.f32.gmra.mxu0 %v43
    %v159 = vpop.f32.mrf.mxu0
    %v160 = vadd.f32 0.0, %v159
    %v161 = vpop.f32.mrf.mxu0
    %162 = vmatprep.mubr.f32.mxu0 %v46
    %163 = vmatmul.mubr.f32.gmra.mxu0 %v45
    %v164 = vpop.f32.mrf.mxu0
    %v165 = vadd.f32 0.0, %v164
    %v166 = vpop.f32.mrf.mxu0
    %167 = vmatprep.mubr.f32.mxu0 %v48
    %168 = vmatmul.mubr.f32.gmra.mxu0 %v47
    %v169 = vpop.f32.mrf.mxu0
    %v170 = vadd.f32 0.0, %v169
    %v171 = vpop.f32.mrf.mxu0
    %172 = vmatprep.mubr.f32.mxu0 %v50
    %173 = vmatmul.mubr.f32.gmra.mxu0 %v49
    %v174 = vpop.f32.mrf.mxu0
    %v175 = vadd.f32 0.0, %v174
    %v176 = vpop.f32.mrf.mxu0
    %177 = vmatprep.mubr.f32.mxu0 %v52
    %178 = vmatmul.mubr.f32.gmra.mxu0 %v51
    %v179 = vpop.f32.mrf.mxu0
    %v180 = vadd.f32 0.0, %v179
    %v181 = vpop.f32.mrf.mxu0
    %182 = vmatprep.mubr.f32.mxu0 %v54
    %183 = vmatmul.mubr.f32.gmra.mxu0 %v53
    %v184 = vpop.f32.mrf.mxu0
    %v185 = vadd.f32 0.0, %v184
    %v186 = vpop.f32.mrf.mxu0
    %187 = vmatprep.mubr.f32.mxu0 %v56
    %188 = vmatmul.mubr.f32.gmra.mxu0 %v55
    %v189 = vpop.f32.mrf.mxu0
    %v190 = vadd.f32 0.0, %v189
    %v191 = vpop.f32.mrf.mxu0
    %192 = vmatprep.mubr.f32.mxu0 %v58
    %193 = vmatmul.mubr.f32.gmra.mxu0 %v57
    %v194 = vpop.f32.mrf.mxu0
    %v195 = vadd.f32 0.0, %v194
    %v196 = vpop.f32.mrf.mxu0
    %197 = vmatprep.mubr.f32.mxu0 %v60
    %198 = vmatmul.mubr.f32.gmra.mxu0 %v59
    %v199 = vpop.f32.mrf.mxu0
    %v200 = vadd.f32 0.0, %v199
    %v201 = vpop.f32.mrf.mxu0
    %202 = vmatprep.mubr.f32.mxu0 %v62
    %203 = vmatmul.mubr.f32.gmra.mxu0 %v61
    %v204 = vpop.f32.mrf.mxu0
    %v205 = vadd.f32 0.0, %v204
    %v206 = vpop.f32.mrf.mxu0
    %207 = vdwg.mxu0
    %v208 = vmul.f32 %v130, 0.00390625
    %v209 = vmul.f32 %v135, 0.00390625
    %v210 = vmul.f32 %v140, 0.00390625
    %v211 = vmul.f32 %v145, 0.00390625
    %v212 = vmul.f32 %v150, 0.00390625
    %v213 = vmul.f32 %v155, 0.00390625
    %v214 = vmul.f32 %v160, 0.00390625
    %v215 = vmul.f32 %v165, 0.00390625
    %v216 = vmul.f32 %v170, 0.00390625
    %v217 = vmul.f32 %v175, 0.00390625
    %v218 = vmul.f32 %v180, 0.00390625
    %v219 = vmul.f32 %v185, 0.00390625
    %v220 = vmul.f32 %v190, 0.00390625
    %v221 = vmul.f32 %v195, 0.00390625
    %v222 = vmul.f32 %v200, 0.00390625
    %v223 = vmul.f32 %v205, 0.00390625
    %v224 = vmax.f32 %v31, %v32
    %225 = vmax.xlane.f32.xlu0 %v224
    %v226 = vpop.xlane.xlu0 %225
    %v227 = vmax.f32 %v33, %v34
    %228 = vmax.xlane.f32.xlu0 %v227
    %v229 = vpop.xlane.xlu0 %228
    %v230 = vmax.f32 %v35, %v36
    %231 = vmax.xlane.f32.xlu0 %v230
    %v232 = vpop.xlane.xlu0 %231
    %v233 = vmax.f32 %v37, %v38
    %234 = vmax.xlane.f32.xlu0 %v233
    %v235 = vpop.xlane.xlu0 %234
    %v236 = vmax.f32 %v39, %v40
    %237 = vmax.xlane.f32.xlu0 %v236
    %v238 = vpop.xlane.xlu0 %237
    %v239 = vmax.f32 %v41, %v42
    %240 = vmax.xlane.f32.xlu0 %v239
    %v241 = vpop.xlane.xlu0 %240
    %v242 = vmax.f32 %v43, %v44
    %243 = vmax.xlane.f32.xlu0 %v242
    %v244 = vpop.xlane.xlu0 %243
    %v245 = vmax.f32 %v45, %v46
    %246 = vmax.xlane.f32.xlu0 %v245
    %v247 = vpop.xlane.xlu0 %246
    %v248 = vmax.f32 %v47, %v48
    %249 = vmax.xlane.f32.xlu0 %v248
    %v250 = vpop.xlane.xlu0 %249
    %v251 = vmax.f32 %v49, %v50
    %252 = vmax.xlane.f32.xlu0 %v251
    %v253 = vpop.xlane.xlu0 %252
    %v254 = vmax.f32 %v51, %v52
    %255 = vmax.xlane.f32.xlu0 %v254
    %v256 = vpop.xlane.xlu0 %255
    %v257 = vmax.f32 %v53, %v54
    %258 = vmax.xlane.f32.xlu0 %v257
    %v259 = vpop.xlane.xlu0 %258
    %v260 = vmax.f32 %v55, %v56
    %261 = vmax.xlane.f32.xlu0 %v260
    %v262 = vpop.xlane.xlu0 %261
    %v263 = vmax.f32 %v57, %v58
    %264 = vmax.xlane.f32.xlu0 %v263
    %v265 = vpop.xlane.xlu0 %264
    %v266 = vmax.f32 %v59, %v60
    %267 = vmax.xlane.f32.xlu0 %v266
    %v268 = vpop.xlane.xlu0 %267
    %v269 = vmax.f32 %v61, %v62
    %270 = vmax.xlane.f32.xlu0 %v269
    %v271 = vpop.xlane.xlu0 %270
    %v272 = vlaneseq
    %v273 = vand.u32 %v272, 127
    %vm274 = vcmp.eq.s32.totalorder %v273, 0
    %276 = vset.pattern.permute.xlu0 0
    %277 = vperm.xlu0 %276, %v208
    %v278 = vpop.permute.xlu0 %277
    %281 = vset.pattern.permute.xlu0 0
    %282 = vperm.xlu0 %281, %v209
    %v283 = vpop.permute.xlu0 %282
    %286 = vset.pattern.permute.xlu0 0
    %287 = vperm.xlu0 %286, %v210
    %v288 = vpop.permute.xlu0 %287
    %291 = vset.pattern.permute.xlu0 0
    %292 = vperm.xlu0 %291, %v211
    %v293 = vpop.permute.xlu0 %292
    %296 = vset.pattern.permute.xlu0 0
    %297 = vperm.xlu0 %296, %v212
    %v298 = vpop.permute.xlu0 %297
    %301 = vset.pattern.permute.xlu0 0
    %302 = vperm.xlu0 %301, %v213
    %v303 = vpop.permute.xlu0 %302
    %306 = vset.pattern.permute.xlu0 0
    %307 = vperm.xlu0 %306, %v214
    %v308 = vpop.permute.xlu0 %307
    %311 = vset.pattern.permute.xlu0 0
    %312 = vperm.xlu0 %311, %v215
    %v313 = vpop.permute.xlu0 %312
    %v315 = vsel %vm274, %v278, 0.0
    %v316 = vsel %vm274, %v283, 0.0
    %v317 = vsel %vm274, %v288, 0.0
    %v318 = vsel %vm274, %v293, 0.0
    %v319 = vsel %vm274, %v298, 0.0
    %v320 = vsel %vm274, %v303, 0.0
    %v321 = vsel %vm274, %v308, 0.0
    %v322 = vsel %vm274, %v313, 0.0
    %v323 = vadd.f32 %v315, 0.0
    %v324 = vadd.f32 %v316, 0.0
    %v325 = vadd.f32 %v317, 0.0
    %v326 = vadd.f32 %v318, 0.0
    %v327 = vadd.f32 %v319, 0.0
    %v328 = vadd.f32 %v320, 0.0
    %v329 = vadd.f32 %v321, 0.0
    %v330 = vadd.f32 %v322, 0.0
    %vm331 = vcmp.eq.s32.totalorder %v273, 2
    %v332 = vsel %vm331, %v226, 0.0
    %v333 = vsel %vm331, %v229, 0.0
    %v334 = vsel %vm331, %v232, 0.0
    %v335 = vsel %vm331, %v235, 0.0
    %v336 = vsel %vm331, %v238, 0.0
    %v337 = vsel %vm331, %v241, 0.0
    %v338 = vsel %vm331, %v244, 0.0
    %v339 = vsel %vm331, %v247, 0.0
    %v340 = vadd.f32 %v323, %v332
    %v341 = vadd.f32 %v324, %v333
    %v342 = vadd.f32 %v325, %v334
    %v343 = vadd.f32 %v326, %v335
    %v344 = vadd.f32 %v327, %v336
    %v345 = vadd.f32 %v328, %v337
    %v346 = vadd.f32 %v329, %v338
    %v347 = vadd.f32 %v330, %v339
    %vm348 = vcmp.eq.s32.totalorder %v273, 1
    %350 = vset.pattern.permute.xlu0 0
    %351 = vperm.xlu0 %350, %v216
    %v352 = vpop.permute.xlu0 %351
    %355 = vset.pattern.permute.xlu0 0
    %356 = vperm.xlu0 %355, %v217
    %v357 = vpop.permute.xlu0 %356
    %360 = vset.pattern.permute.xlu0 0
    %361 = vperm.xlu0 %360, %v218
    %v362 = vpop.permute.xlu0 %361
    %365 = vset.pattern.permute.xlu0 0
    %366 = vperm.xlu0 %365, %v219
    %v367 = vpop.permute.xlu0 %366
    %370 = vset.pattern.permute.xlu0 0
    %371 = vperm.xlu0 %370, %v220
    %v372 = vpop.permute.xlu0 %371
    %375 = vset.pattern.permute.xlu0 0
    %376 = vperm.xlu0 %375, %v221
    %v377 = vpop.permute.xlu0 %376
    %380 = vset.pattern.permute.xlu0 0
    %381 = vperm.xlu0 %380, %v222
    %v382 = vpop.permute.xlu0 %381
    %385 = vset.pattern.permute.xlu0 0
    %386 = vperm.xlu0 %385, %v223
    %v387 = vpop.permute.xlu0 %386
    %v389 = vsel %vm348, %v352, 0.0
    %v390 = vsel %vm348, %v357, 0.0
    %v391 = vsel %vm348, %v362, 0.0
    %v392 = vsel %vm348, %v367, 0.0
    %v393 = vsel %vm348, %v372, 0.0
    %v394 = vsel %vm348, %v377, 0.0
    %v395 = vsel %vm348, %v382, 0.0
    %v396 = vsel %vm348, %v387, 0.0
    %v397 = vadd.f32 %v340, %v389
    %v398 = vadd.f32 %v341, %v390
    %v399 = vadd.f32 %v342, %v391
    %v400 = vadd.f32 %v343, %v392
    %v401 = vadd.f32 %v344, %v393
    %v402 = vadd.f32 %v345, %v394
    %v403 = vadd.f32 %v346, %v395
    %v404 = vadd.f32 %v347, %v396
    %vm405 = vcmp.eq.s32.totalorder %v273, 3
    %v406 = vsel %vm405, %v250, 0.0
    %v407 = vsel %vm405, %v253, 0.0
    %v408 = vsel %vm405, %v256, 0.0
    %v409 = vsel %vm405, %v259, 0.0
    %v410 = vsel %vm405, %v262, 0.0
    %v411 = vsel %vm405, %v265, 0.0
    %v412 = vsel %vm405, %v268, 0.0
    %v413 = vsel %vm405, %v271, 0.0
    %v414 = vadd.f32 %v397, %v406
    %v415 = vadd.f32 %v398, %v407
    %v416 = vadd.f32 %v399, %v408
    %v417 = vadd.f32 %v400, %v409
    %v418 = vadd.f32 %v401, %v410
    %v419 = vadd.f32 %v402, %v411
    %v420 = vadd.f32 %v403, %v412
    %v421 = vadd.f32 %v404, %v413
    %v422 = vld [vmem:[%s1] sm:$0xf]
    %v423 = vld [vmem:[%s2] sm:$0xff]
    %v424 = vld [vmem:[%s2 + $0x8] sm:$0xff]
    %v425 = vld [vmem:[%s2 + $0x10] sm:$0xff]
    %v426 = vld [vmem:[%s2 + $0x18] sm:$0xff]
    %v427 = vld [vmem:[%s2 + $0x20] sm:$0xff]
    %v428 = vld [vmem:[%s2 + $0x28] sm:$0xff]
    %v429 = vld [vmem:[%s2 + $0x30] sm:$0xff]
    %v430 = vld [vmem:[%s2 + $0x38] sm:$0xff]
    %vm431 = vcmask 523264
    %v433 = vsel %vm431, %v422, 0
    %435 = vmatprep.subr.mxu0 0.0
    %436 = vmatpush1.msra.mxu0 0.0
    %437 = vmatprep.subr.mxu0 0.0
    %438 = vmatpush1.msra.mxu0 0.0
    %439 = vmatprep.subr.mxu0 0.0
    %440 = vmatpush1.msra.mxu0 0.0
    %441 = vmatprep.subr.mxu0 0.0
    %442 = vmatpush1.msra.mxu0 0.0
    %443 = vmatprep.subr.mxu0 0.0
    %444 = vmatpush1.msra.mxu0 0.0
    %445 = vmatprep.subr.mxu0 0.0
    %446 = vmatpush1.msra.mxu0 0.0
    %447 = vmatprep.subr.mxu0 0.0
    %448 = vmatpush1.msra.mxu0 0.0
    %449 = vmatprep.subr.mxu0 0.0
    %450 = vmatpush1.msra.mxu0 0.0
    %451 = vmatprep.subr.mxu0 0.0
    %452 = vmatpush1.msra.mxu0 %v421
    %453 = vmatprep.subr.mxu0 0.0
    %454 = vmatpush1.msra.mxu0 %v420
    %455 = vmatprep.subr.mxu0 0.0
    %456 = vmatpush1.msra.mxu0 %v419
    %457 = vmatprep.subr.mxu0 0.0
    %458 = vmatpush1.msra.mxu0 %v418
    %459 = vmatprep.subr.mxu0 0.0
    %460 = vmatpush1.msra.mxu0 %v417
    %461 = vmatprep.subr.mxu0 0.0
    %462 = vmatpush1.msra.mxu0 %v416
    %463 = vmatprep.subr.mxu0 0.0
    %464 = vmatpush1.msra.mxu0 %v415
    %465 = vmatprep.subr.mxu0 0.0
    %466 = vmatpush1.msra.mxu0 %v414
    %467 = vmatprep.subr.mxu0 0.0
    %468 = vmatpush2.msra.mxu0 0.0
    %469 = vmatprep.subr.mxu0 0.0
    %470 = vmatpush2.msra.mxu0 0.0
    %471 = vmatprep.subr.mxu0 0.0
    %472 = vmatpush2.msra.mxu0 0.0
    %473 = vmatprep.subr.mxu0 0.0
    %474 = vmatpush2.msra.mxu0 0.0
    %475 = vmatprep.subr.mxu0 0.0
    %476 = vmatpush2.msra.mxu0 0.0
    %477 = vmatprep.subr.mxu0 0.0
    %478 = vmatpush2.msra.mxu0 0.0
    %479 = vmatprep.subr.mxu0 0.0
    %480 = vmatpush2.msra.mxu0 0.0
    %481 = vmatprep.subr.mxu0 0.0
    %482 = vmatpush2.msra.mxu0 0.0
    %483 = vmatprep.subr.mxu0 0.0
    %484 = vmatpush2.msra.mxu0 0.0
    %485 = vmatprep.subr.mxu0 0.0
    %486 = vmatpush2.msra.mxu0 0.0
    %487 = vmatprep.subr.mxu0 0.0
    %488 = vmatpush2.msra.mxu0 0.0
    %489 = vmatprep.subr.mxu0 0.0
    %490 = vmatpush2.msra.mxu0 0.0
    %491 = vmatprep.subr.mxu0 0.0
    %492 = vmatpush2.msra.mxu0 0.0
    %493 = vmatprep.subr.mxu0 0.0
    %494 = vmatpush2.msra.mxu0 0.0
    %495 = vmatprep.subr.mxu0 0.0
    %496 = vmatpush2.msra.mxu0 0.0
    %497 = vmatprep.subr.mxu0 0.0
    %498 = vmatpush2.msra.mxu0 0.0
    %499 = vmatprep.mubr.f32.mxu0 0.0
    %500 = vmatmul.mubr.f32.gmra.mxu0 %v433
    %v501 = vpop.f32.mrf.mxu0
    %v502 = vadd.f32 0.0, %v501
    %v503 = vpop.f32.mrf.mxu0
    %504 = vdwg.mxu0
    %v505 = vmax.f32 %v502, 0.0
    %vm506 = vcmask 31744
    %v508 = vsel %vm506, %v423, 0
    %v511 = vsel %vm506, %v424, 0
    %v514 = vsel %vm506, %v425, 0
    %v517 = vsel %vm506, %v426, 0
    %v520 = vsel %vm506, %v427, 0
    %v523 = vsel %vm506, %v428, 0
    %v526 = vsel %vm506, %v429, 0
    %v529 = vsel %vm506, %v430, 0
    %vm531 = vcmask 1043456
    %v533 = vsel %vm531, %v505, 0
    %535 = vmatprep.subr.mxu0 0.0
    %536 = vmatpush1.msra.mxu0 0.0
    %537 = vmatprep.subr.mxu0 0.0
    %538 = vmatpush1.msra.mxu0 0.0
    %539 = vmatprep.subr.mxu0 0.0
    %540 = vmatpush1.msra.mxu0 0.0
    %541 = vmatprep.subr.mxu0 0.0
    %542 = vmatpush1.msra.mxu0 0.0
    %543 = vmatprep.subr.mxu0 0.0
    %544 = vmatpush1.msra.mxu0 0.0
    %545 = vmatprep.subr.mxu0 0.0
    %546 = vmatpush1.msra.mxu0 0.0
    %547 = vmatprep.subr.mxu0 0.0
    %548 = vmatpush1.msra.mxu0 0.0
    %549 = vmatprep.subr.mxu0 0.0
    %550 = vmatpush1.msra.mxu0 0.0
    %551 = vmatprep.subr.mxu0 0.0
    %552 = vmatpush1.msra.mxu0 0.0
    %553 = vmatprep.subr.mxu0 0.0
    %554 = vmatpush1.msra.mxu0 0.0
    %555 = vmatprep.subr.mxu0 0.0
    %556 = vmatpush1.msra.mxu0 0.0
    %557 = vmatprep.subr.mxu0 0.0
    %558 = vmatpush1.msra.mxu0 0.0
    %559 = vmatprep.subr.mxu0 0.0
    %560 = vmatpush1.msra.mxu0 0.0
    %561 = vmatprep.subr.mxu0 0.0
    %562 = vmatpush1.msra.mxu0 0.0
    %563 = vmatprep.subr.mxu0 0.0
    %564 = vmatpush1.msra.mxu0 0.0
    %565 = vmatprep.subr.mxu0 0.0
    %566 = vmatpush1.msra.mxu0 %v533
    %567 = vmatprep.subr.mxu0 0.0
    %568 = vmatpush2.msra.mxu0 0.0
    %569 = vmatprep.subr.mxu0 0.0
    %570 = vmatpush2.msra.mxu0 0.0
    %571 = vmatprep.subr.mxu0 0.0
    %572 = vmatpush2.msra.mxu0 0.0
    %573 = vmatprep.subr.mxu0 0.0
    %574 = vmatpush2.msra.mxu0 0.0
    %575 = vmatprep.subr.mxu0 0.0
    %576 = vmatpush2.msra.mxu0 0.0
    %577 = vmatprep.subr.mxu0 0.0
    %578 = vmatpush2.msra.mxu0 0.0
    %579 = vmatprep.subr.mxu0 0.0
    %580 = vmatpush2.msra.mxu0 0.0
    %581 = vmatprep.subr.mxu0 0.0
    %582 = vmatpush2.msra.mxu0 0.0
    %583 = vmatprep.subr.mxu0 0.0
    %584 = vmatpush2.msra.mxu0 0.0
    %585 = vmatprep.subr.mxu0 0.0
    %586 = vmatpush2.msra.mxu0 0.0
    %587 = vmatprep.subr.mxu0 0.0
    %588 = vmatpush2.msra.mxu0 0.0
    %589 = vmatprep.subr.mxu0 0.0
    %590 = vmatpush2.msra.mxu0 0.0
    %591 = vmatprep.subr.mxu0 0.0
    %592 = vmatpush2.msra.mxu0 0.0
    %593 = vmatprep.subr.mxu0 0.0
    %594 = vmatpush2.msra.mxu0 0.0
    %595 = vmatprep.subr.mxu0 0.0
    %596 = vmatpush2.msra.mxu0 0.0
    %597 = vmatprep.subr.mxu0 0.0
    %598 = vmatpush2.msra.mxu0 0.0
    %599 = vmatprep.mubr.f32.mxu0 0.0
    %600 = vmatmul.mubr.f32.gmra.mxu0 %v508
    %v601 = vpop.f32.mrf.mxu0
    %v602 = vadd.f32 0.0, %v601
    %v603 = vpop.f32.mrf.mxu0
    %604 = vmatprep.mubr.f32.mxu0 0.0
    %605 = vmatmul.mubr.f32.gmra.mxu0 %v511
    %v606 = vpop.f32.mrf.mxu0
    %v607 = vadd.f32 0.0, %v606
    %v608 = vpop.f32.mrf.mxu0
    %609 = vmatprep.mubr.f32.mxu0 0.0
    %610 = vmatmul.mubr.f32.gmra.mxu0 %v514
    %v611 = vpop.f32.mrf.mxu0
    %v612 = vadd.f32 0.0, %v611
    %v613 = vpop.f32.mrf.mxu0
    %614 = vmatprep.mubr.f32.mxu0 0.0
    %615 = vmatmul.mubr.f32.gmra.mxu0 %v517
    %v616 = vpop.f32.mrf.mxu0
    %v617 = vadd.f32 0.0, %v616
    %v618 = vpop.f32.mrf.mxu0
    %619 = vmatprep.mubr.f32.mxu0 0.0
    %620 = vmatmul.mubr.f32.gmra.mxu0 %v520
    %v621 = vpop.f32.mrf.mxu0
    %v622 = vadd.f32 0.0, %v621
    %v623 = vpop.f32.mrf.mxu0
    %624 = vmatprep.mubr.f32.mxu0 0.0
    %625 = vmatmul.mubr.f32.gmra.mxu0 %v523
    %v626 = vpop.f32.mrf.mxu0
    %v627 = vadd.f32 0.0, %v626
    %v628 = vpop.f32.mrf.mxu0
    %629 = vmatprep.mubr.f32.mxu0 0.0
    %630 = vmatmul.mubr.f32.gmra.mxu0 %v526
    %v631 = vpop.f32.mrf.mxu0
    %v632 = vadd.f32 0.0, %v631
    %v633 = vpop.f32.mrf.mxu0
    %634 = vmatprep.mubr.f32.mxu0 0.0
    %635 = vmatmul.mubr.f32.gmra.mxu0 %v529
    %v636 = vpop.f32.mrf.mxu0
    %v637 = vadd.f32 0.0, %v636
    %v638 = vpop.f32.mrf.mxu0
    %639 = vdwg.mxu0
    %648 = vrot.lane.b32.xlu0 %v602, 126
    %v649 = vpop.permute.xlu0 %648
    %650 = vrot.lane.b32.xlu0 %v607, 126
    %v651 = vpop.permute.xlu0 %650
    %652 = vrot.lane.b32.xlu0 %v612, 126
    %v653 = vpop.permute.xlu0 %652
    %654 = vrot.lane.b32.xlu0 %v617, 126
    %v655 = vpop.permute.xlu0 %654
    %656 = vrot.lane.b32.xlu0 %v622, 126
    %v657 = vpop.permute.xlu0 %656
    %658 = vrot.lane.b32.xlu0 %v627, 126
    %v659 = vpop.permute.xlu0 %658
    %660 = vrot.lane.b32.xlu0 %v632, 126
    %v661 = vpop.permute.xlu0 %660
    %662 = vrot.lane.b32.xlu0 %v637, 126
    %v663 = vpop.permute.xlu0 %662
    %v672 = vadd.f32 %v602, %v649
    %v673 = vadd.f32 %v607, %v651
    %v674 = vadd.f32 %v612, %v653
    %v675 = vadd.f32 %v617, %v655
    %v676 = vadd.f32 %v622, %v657
    %v677 = vadd.f32 %v627, %v659
    %v678 = vadd.f32 %v632, %v661
    %v679 = vadd.f32 %v637, %v663
    %v680 = vxor.u32 %v672, 2147483648
    %v681 = vxor.u32 %v673, 2147483648
    %v682 = vxor.u32 %v674, 2147483648
    %v683 = vxor.u32 %v675, 2147483648
    %v684 = vxor.u32 %v676, 2147483648
    %v685 = vxor.u32 %v677, 2147483648
    %v686 = vxor.u32 %v678, 2147483648
    %v687 = vxor.u32 %v679, 2147483648
    %v688 = vmul.f32 %v680, 1.442695
    %v689 = vpow.pop %v688
    %v690 = vmul.f32 %v681, 1.442695
    %v691 = vpow.pop %v690
    %v692 = vmul.f32 %v682, 1.442695
    %v693 = vpow.pop %v692
    %v694 = vmul.f32 %v683, 1.442695
    %v695 = vpow.pop %v694
    %v696 = vmul.f32 %v684, 1.442695
    %v697 = vpow.pop %v696
    %v698 = vmul.f32 %v685, 1.442695
    %v699 = vpow.pop %v698
    %v700 = vmul.f32 %v686, 1.442695
    %v701 = vpow.pop %v700
    %v702 = vmul.f32 %v687, 1.442695
    %v703 = vpow.pop %v702
    %v704 = vadd.f32 %v689, 1.0
    %v705 = vadd.f32 %v691, 1.0
    %v706 = vadd.f32 %v693, 1.0
    %v707 = vadd.f32 %v695, 1.0
    %v708 = vadd.f32 %v697, 1.0
    %v709 = vadd.f32 %v699, 1.0
    %v710 = vadd.f32 %v701, 1.0
    %v711 = vadd.f32 %v703, 1.0
    %v712 = vrcp.pop %v704
    %v713 = vmul.f32 1.0, %v712
    %v714 = vrcp.pop %v705
    %v715 = vmul.f32 1.0, %v714
    %v716 = vrcp.pop %v706
    %v717 = vmul.f32 1.0, %v716
    %v718 = vrcp.pop %v707
    %v719 = vmul.f32 1.0, %v718
    %v720 = vrcp.pop %v708
    %v721 = vmul.f32 1.0, %v720
    %v722 = vrcp.pop %v709
    %v723 = vmul.f32 1.0, %v722
    %v724 = vrcp.pop %v710
    %v725 = vmul.f32 1.0, %v724
    %v726 = vrcp.pop %v711
    %v727 = vmul.f32 1.0, %v726
    %vm728 = vcmask 7168
    %729 = vst.msk [vmem:[%s3] sm:$0xff] %vm728, %v713
    %730 = vst.msk [vmem:[%s3 + $0x8] sm:$0xff] %vm728, %v715
    %731 = vst.msk [vmem:[%s3 + $0x10] sm:$0xff] %vm728, %v717
    %732 = vst.msk [vmem:[%s3 + $0x18] sm:$0xff] %vm728, %v719
    %733 = vst.msk [vmem:[%s3 + $0x20] sm:$0xff] %vm728, %v721
    %734 = vst.msk [vmem:[%s3 + $0x28] sm:$0xff] %vm728, %v723
    %735 = vst.msk [vmem:[%s3 + $0x30] sm:$0xff] %vm728, %v725
    %736 = vst.msk [vmem:[%s3 + $0x38] sm:$0xff] %vm728, %v727
    %738 = vset.pattern.permute.xlu0 0
    %739 = vperm.xlu0 %738, %v713
    %v740 = vpop.permute.xlu0 %739
    %743 = vset.pattern.permute.xlu0 0
    %744 = vperm.xlu0 %743, %v715
    %v745 = vpop.permute.xlu0 %744
    %748 = vset.pattern.permute.xlu0 0
    %749 = vperm.xlu0 %748, %v717
    %v750 = vpop.permute.xlu0 %749
    %753 = vset.pattern.permute.xlu0 0
    %754 = vperm.xlu0 %753, %v719
    %v755 = vpop.permute.xlu0 %754
    %758 = vset.pattern.permute.xlu0 0
    %759 = vperm.xlu0 %758, %v721
    %v760 = vpop.permute.xlu0 %759
    %763 = vset.pattern.permute.xlu0 0
    %764 = vperm.xlu0 %763, %v723
    %v765 = vpop.permute.xlu0 %764
    %768 = vset.pattern.permute.xlu0 0
    %769 = vperm.xlu0 %768, %v725
    %v770 = vpop.permute.xlu0 %769
    %773 = vset.pattern.permute.xlu0 0
    %774 = vperm.xlu0 %773, %v727
    %v775 = vpop.permute.xlu0 %774
    %v777 = vmul.f32 %v31, %v740
    %v778 = vmul.f32 %v32, %v740
    %v779 = vmul.f32 %v33, %v745
    %v780 = vmul.f32 %v34, %v745
    %v781 = vmul.f32 %v35, %v750
    %v782 = vmul.f32 %v36, %v750
    %v783 = vmul.f32 %v37, %v755
    %v784 = vmul.f32 %v38, %v755
    %v785 = vmul.f32 %v39, %v760
    %v786 = vmul.f32 %v40, %v760
    %v787 = vmul.f32 %v41, %v765
    %v788 = vmul.f32 %v42, %v765
    %v789 = vmul.f32 %v43, %v770
    %v790 = vmul.f32 %v44, %v770
    %v791 = vmul.f32 %v45, %v775
    %v792 = vmul.f32 %v46, %v775
    %793 = vst [vmem:[#allocation5] sm:$0xff] %v777
    %794 = vst [vmem:[#allocation5 + $0x8] sm:$0xff] %v778
    %795 = vst [vmem:[#allocation5 + $0x10] sm:$0xff] %v779
    %796 = vst [vmem:[#allocation5 + $0x18] sm:$0xff] %v780
    %797 = vst [vmem:[#allocation5 + $0x20] sm:$0xff] %v781
    %798 = vst [vmem:[#allocation5 + $0x28] sm:$0xff] %v782
    %799 = vst [vmem:[#allocation5 + $0x30] sm:$0xff] %v783
    %800 = vst [vmem:[#allocation5 + $0x38] sm:$0xff] %v784
    %801 = vst [vmem:[#allocation5 + $0x40] sm:$0xff] %v785
    %802 = vst [vmem:[#allocation5 + $0x48] sm:$0xff] %v786
    %803 = vst [vmem:[#allocation5 + $0x50] sm:$0xff] %v787
    %804 = vst [vmem:[#allocation5 + $0x58] sm:$0xff] %v788
    %805 = vst [vmem:[#allocation5 + $0x60] sm:$0xff] %v789
    %806 = vst [vmem:[#allocation5 + $0x68] sm:$0xff] %v790
    %807 = vst [vmem:[#allocation5 + $0x70] sm:$0xff] %v791
    %808 = vst [vmem:[#allocation5 + $0x78] sm:$0xff] %v792
    %809 = vrot.lane.b32.xlu0 %v713, 127
    %v810 = vpop.permute.xlu0 %809
    %811 = vrot.lane.b32.xlu0 %v715, 127
    %v812 = vpop.permute.xlu0 %811
    %813 = vrot.lane.b32.xlu0 %v717, 127
    %v814 = vpop.permute.xlu0 %813
    %815 = vrot.lane.b32.xlu0 %v719, 127
    %v816 = vpop.permute.xlu0 %815
    %817 = vrot.lane.b32.xlu0 %v721, 127
    %v818 = vpop.permute.xlu0 %817
    %819 = vrot.lane.b32.xlu0 %v723, 127
    %v820 = vpop.permute.xlu0 %819
    %821 = vrot.lane.b32.xlu0 %v725, 127
    %v822 = vpop.permute.xlu0 %821
    %823 = vrot.lane.b32.xlu0 %v727, 127
    %v824 = vpop.permute.xlu0 %823
    %s833 = scalar_lea.vmem %s3, 64
    %834 = vst.msk [vmem:[%s833] sm:$0xff] %vm728, %v810
    %835 = vst.msk [vmem:[%s833 + $0x8] sm:$0xff] %vm728, %v812
    %836 = vst.msk [vmem:[%s833 + $0x10] sm:$0xff] %vm728, %v814
    %837 = vst.msk [vmem:[%s833 + $0x18] sm:$0xff] %vm728, %v816
    %838 = vst.msk [vmem:[%s833 + $0x20] sm:$0xff] %vm728, %v818
    %839 = vst.msk [vmem:[%s833 + $0x28] sm:$0xff] %vm728, %v820
    %840 = vst.msk [vmem:[%s833 + $0x30] sm:$0xff] %vm728, %v822
    %841 = vst.msk [vmem:[%s833 + $0x38] sm:$0xff] %vm728, %v824
    %842 = vset.pattern.permute.xlu0 1
    %843 = vperm.xlu0 %842, %v713
    %v844 = vpop.permute.xlu0 %843
    %846 = vset.pattern.permute.xlu0 1
    %847 = vperm.xlu0 %846, %v715
    %v848 = vpop.permute.xlu0 %847
    %850 = vset.pattern.permute.xlu0 1
    %851 = vperm.xlu0 %850, %v717
    %v852 = vpop.permute.xlu0 %851
    %854 = vset.pattern.permute.xlu0 1
    %855 = vperm.xlu0 %854, %v719
    %v856 = vpop.permute.xlu0 %855
    %858 = vset.pattern.permute.xlu0 1
    %859 = vperm.xlu0 %858, %v721
    %v860 = vpop.permute.xlu0 %859
    %862 = vset.pattern.permute.xlu0 1
    %863 = vperm.xlu0 %862, %v723
    %v864 = vpop.permute.xlu0 %863
    %866 = vset.pattern.permute.xlu0 1
    %867 = vperm.xlu0 %866, %v725
    %v868 = vpop.permute.xlu0 %867
    %870 = vset.pattern.permute.xlu0 1
    %871 = vperm.xlu0 %870, %v727
    %v872 = vpop.permute.xlu0 %871
    %v874 = vmul.f32 %v47, %v844
    %v875 = vmul.f32 %v48, %v844
    %v876 = vmul.f32 %v49, %v848
    %v877 = vmul.f32 %v50, %v848
    %v878 = vmul.f32 %v51, %v852
    %v879 = vmul.f32 %v52, %v852
    %v880 = vmul.f32 %v53, %v856
    %v881 = vmul.f32 %v54, %v856
    %v882 = vmul.f32 %v55, %v860
    %v883 = vmul.f32 %v56, %v860
    %v884 = vmul.f32 %v57, %v864
    %v885 = vmul.f32 %v58, %v864
    %v886 = vmul.f32 %v59, %v868
    %v887 = vmul.f32 %v60, %v868
    %v888 = vmul.f32 %v61, %v872
    %v889 = vmul.f32 %v62, %v872
    %s890 = scalar_lea.vmem [#allocation5], 128
    %891 = vst [vmem:[%s890] sm:$0xff] %v874
    %892 = vst [vmem:[%s890 + $0x8] sm:$0xff] %v875
    %893 = vst [vmem:[%s890 + $0x10] sm:$0xff] %v876
    %894 = vst [vmem:[%s890 + $0x18] sm:$0xff] %v877
    %895 = vst [vmem:[%s890 + $0x20] sm:$0xff] %v878
    %896 = vst [vmem:[%s890 + $0x28] sm:$0xff] %v879
    %897 = vst [vmem:[%s890 + $0x30] sm:$0xff] %v880
    %898 = vst [vmem:[%s890 + $0x38] sm:$0xff] %v881
    %899 = vst [vmem:[%s890 + $0x40] sm:$0xff] %v882
    %900 = vst [vmem:[%s890 + $0x48] sm:$0xff] %v883
    %901 = vst [vmem:[%s890 + $0x50] sm:$0xff] %v884
    %902 = vst [vmem:[%s890 + $0x58] sm:$0xff] %v885
    %903 = vst [vmem:[%s890 + $0x60] sm:$0xff] %v886
    %904 = vst [vmem:[%s890 + $0x68] sm:$0xff] %v887
    %905 = vst [vmem:[%s890 + $0x70] sm:$0xff] %v888
    %906 = vst [vmem:[%s890 + $0x78] sm:$0xff] %v889
    // Predicated region
    $region18: #{tpu_custom_call.1} parent=1 // pred_check
      _
    $region19: #{tpu_custom_call.1} parent=1 // pred_check_branch
      %908 = sbr.rel (0) target = $region21
    $region20: #{tpu_custom_call.1} parent=1 // pred_region
      _
    $region21: #{tpu_custom_call.1} parent=1 // pred_fallthru
      _
    // Predicated region
    $region22: #{tpu_custom_call.1} parent=1 // pred_check
      _
    $region23: #{tpu_custom_call.1} parent=1 // pred_check_branch
      %910 = sbr.rel (0) target = $region25
    $region24: #{tpu_custom_call.1} parent=1 // pred_region
      %s912 = ssub.s32 4096, 4096
      %913 = vsyncadd [#allocation4], %s912
      %s914 = sshll.u32 [#allocation5], 4
      %s915 = int_to_ptr.vmem [resolvable:$true] %s914
      %920 = dma.vmem_to_hbm [thread:$0]  %s915, 4096, %s4, [#allocation4], 256, 256, 16
    $region25: #{tpu_custom_call.1} parent=1 // pred_fallthru
      _
    // Predicated region
    $region26: #{tpu_custom_call.1} parent=1 // pred_check
      _
    $region27: #{tpu_custom_call.1} parent=1 // pred_check_branch
      %922 = sbr.rel (0) target = $region29
    $region28: #{tpu_custom_call.1} parent=1 // pred_region
      _
    $region29: #{tpu_custom_call.1} parent=1 // pred_fallthru
      _
    // Predicated region
    $region30: #{tpu_custom_call.1} parent=1 // pred_check
      _
    $region31: #{tpu_custom_call.1} parent=1 // pred_check_branch
      %924 = sbr.rel (0) target = $region33
    $region32: #{tpu_custom_call.1} parent=1 // pred_region
      %925 = dma.done [#allocation4], 4096
    $region33: #{tpu_custom_call.1} parent=1 // pred_fallthru
      _
    %926 = vsyncpa [#allocation3], 1
    %927 = vsyncpa [#allocation4], 1

</llo_original>
